<compile_context>
chip_gen: v7x
topology: tpu7x:2x2x1
jax: 0.10.0
libtpu: 0.0.40
codegen_flags: <defaults>
</compile_context>

<pallas_src>
import jax
import jax.numpy as jnp
from jax.experimental import pallas as pl
from jax.experimental.pallas import tpu as pltpu


def residual_kernel(x_ref, w_ref, b_ref, o_ref):
    # x_ref, o_ref: (C, tile_s) VMEM tiles (batch dim squeezed out by the BlockSpec).
    # w_ref: (C, C) in SMEM (weight[c_out, c_in]);  b_ref: (C,) in SMEM.
    x = x_ref[...].astype(jnp.float32)            # (C, tile_s), lane-dense
    C = x_ref.shape[0]

    out_rows = []
    for co in range(C):                           # unrolled VPU MAC loop (tiny C)
        acc = x[0:1, :] * w_ref[co, 0]
        for ci in range(1, C):
            acc = acc + x[ci:ci + 1, :] * w_ref[co, ci]
        acc = acc + b_ref[co]                     # conv bias
        y = jnp.maximum(acc, 0.0)                 # ReLU
        out_rows.append(y + x[co:co + 1, :])      # residual (skip = identity)

    o_ref[...] = jnp.concatenate(out_rows, axis=0).astype(o_ref.dtype)


def _pick_spatial_tile(S, max_tile=2048):
    """Largest multiple of 128 that divides S and is <= max_tile; else the full S."""
    cand = (min(max_tile, S) // 128) * 128
    while cand >= 128:
        if S % cand == 0:
            return cand
        cand -= 128
    return S  # full-extent block is always legal


def residual_forward(x_nchw, weight, bias):
    """out = relu(conv1x1(x; weight, bias)) + x, matching the PyTorch Residual block.

    x_nchw: (N, C, H, W)
    weight: (C_out, C_in) == (C, C)   (PyTorch Conv2d 1x1 weight squeezed)
    bias:   (C,)
    """
    N, C, H, W = x_nchw.shape
    S = H * W
    x_rows = x_nchw.reshape(N, C, S)              # contiguous reshape: no HBM traffic
    tile_s = _pick_spatial_tile(S)

    grid = (N, S // tile_s)                       # >= 2 parallel iterations for N >= 2

    out_rows = pl.pallas_call(
        residual_kernel,
        out_shape=jax.ShapeDtypeStruct((N, C, S), x_rows.dtype),
        grid_spec=pltpu.PrefetchScalarGridSpec(
            num_scalar_prefetch=0,
            grid=grid,
            in_specs=[
                # x tile: one batch image, all C channels, tile_s spatial columns.
                pl.BlockSpec((None, C, tile_s), lambda n, s: (n, 0, s)),
                # small conv parameters live in SMEM and are read as scalars.
                pl.BlockSpec(memory_space=pltpu.MemorySpace.SMEM),
                pl.BlockSpec(memory_space=pltpu.MemorySpace.SMEM),
            ],
            out_specs=pl.BlockSpec((None, C, tile_s), lambda n, s: (n, 0, s)),
        ),
        compiler_params=pltpu.CompilerParams(
            dimension_semantics=("parallel", "parallel")),
    )(x_rows, weight, bias)

    return out_rows.reshape(N, C, H, W)           # contiguous reshape back


def residual_reference(x_nchw, weight, bias):
    # Pure-JAX reference of relu(conv1x1(x)) + x.
    y = jnp.einsum('nchw,oc->nohw', x_nchw.astype(jnp.float32),
                   weight.astype(jnp.float32))
    y = y + bias.reshape(1, -1, 1, 1)
    y = jnp.maximum(y, 0.0)
    return (y + x_nchw.astype(jnp.float32)).astype(x_nchw.dtype)


if __name__ == "__main__":
    key = jax.random.PRNGKey(0)
    k_x, k_w, k_b = jax.random.split(key, 3)

    N, C, H, W = 2, 4, 16, 16
    x = jax.random.normal(k_x, (N, C, H, W), dtype=jnp.float32)

    # Deterministic synthetic parameters for the inner Conv2d(C, C, 1).
    fan_in = C
    bound = 1.0 / (fan_in ** 0.5)
    weight = jax.random.uniform(k_w, (C, C), minval=-bound, maxval=bound,
                                dtype=jnp.float32)
    bias = jax.random.uniform(k_b, (C,), minval=-bound, maxval=bound,
                              dtype=jnp.float32)

    out = residual_forward(x, weight, bias)
    out = jax.block_until_ready(out)

    ref = residual_reference(x, weight, bias)
    assert out.shape == x.shape and out.dtype == x.dtype
    assert jnp.allclose(out, ref, atol=1e-5, rtol=1e-5)

    print("KERNEL_OK")
</pallas_src>

<mosaic_0001>
module attributes {stable_mosaic.version = 11 : i64} {
  func.func @residual_kernel(%arg0: i32, %arg1: i32, %arg2: memref<1x4x256xf32, #tpu.memory_space<vmem>>, %arg3: memref<4x4xf32, #tpu.memory_space<smem>>, %arg4: memref<4xf32, #tpu.memory_space<smem>>, %arg5: memref<1x4x256xf32, #tpu.memory_space<vmem>>) attributes {dimension_semantics = [#tpu.dimension_semantics<parallel>, #tpu.dimension_semantics<parallel>], iteration_bounds = array<i64: 2, 1>, scalar_prefetch = 0 : i64, scratch_operands = 0 : i64, tpu.core_type = #tpu.core_type<tc>, window_params = [{transform_indices = @transform_0, window_bounds = array<i64: 1, 4, 256>}, {transform_indices = @transform_1, window_bounds = array<i64: 4, 4>}, {transform_indices = @transform_2, window_bounds = array<i64: 4>}, {transform_indices = @transform_3, window_bounds = array<i64: 1, 4, 256>}]} {
    %c0 = arith.constant 0 : index
    %c0_0 = arith.constant 0 : index
    %c0_1 = arith.constant 0 : index
    %0 = vector.load %arg2[%c0, %c0_0, %c0_1] : memref<1x4x256xf32, #tpu.memory_space<vmem>>, vector<1x4x256xf32>
    %1 = vector.shape_cast %0 : vector<1x4x256xf32> to vector<4x256xf32>
    %2 = vector.extract_strided_slice %1 {offsets = [0, 0], sizes = [1, 256], strides = [1, 1]} : vector<4x256xf32> to vector<1x256xf32>
    %c0_2 = arith.constant 0 : index
    %c0_3 = arith.constant 0 : index
    %3 = memref.load %arg3[%c0_2, %c0_3] : memref<4x4xf32, #tpu.memory_space<smem>>
    %4 = vector.broadcast %3 : f32 to vector<1x256xf32>
    %5 = arith.mulf %2, %4 : vector<1x256xf32>
    %6 = vector.extract_strided_slice %1 {offsets = [1, 0], sizes = [1, 256], strides = [1, 1]} : vector<4x256xf32> to vector<1x256xf32>
    %c0_4 = arith.constant 0 : index
    %c1 = arith.constant 1 : index
    %7 = memref.load %arg3[%c0_4, %c1] : memref<4x4xf32, #tpu.memory_space<smem>>
    %8 = vector.broadcast %7 : f32 to vector<1x256xf32>
    %9 = arith.mulf %6, %8 : vector<1x256xf32>
    %10 = arith.addf %5, %9 : vector<1x256xf32>
    %11 = vector.extract_strided_slice %1 {offsets = [2, 0], sizes = [1, 256], strides = [1, 1]} : vector<4x256xf32> to vector<1x256xf32>
    %c0_5 = arith.constant 0 : index
    %c2 = arith.constant 2 : index
    %12 = memref.load %arg3[%c0_5, %c2] : memref<4x4xf32, #tpu.memory_space<smem>>
    %13 = vector.broadcast %12 : f32 to vector<1x256xf32>
    %14 = arith.mulf %11, %13 : vector<1x256xf32>
    %15 = arith.addf %10, %14 : vector<1x256xf32>
    %16 = vector.extract_strided_slice %1 {offsets = [3, 0], sizes = [1, 256], strides = [1, 1]} : vector<4x256xf32> to vector<1x256xf32>
    %c0_6 = arith.constant 0 : index
    %c3 = arith.constant 3 : index
    %17 = memref.load %arg3[%c0_6, %c3] : memref<4x4xf32, #tpu.memory_space<smem>>
    %18 = vector.broadcast %17 : f32 to vector<1x256xf32>
    %19 = arith.mulf %16, %18 : vector<1x256xf32>
    %20 = arith.addf %15, %19 : vector<1x256xf32>
    %c0_7 = arith.constant 0 : index
    %21 = memref.load %arg4[%c0_7] : memref<4xf32, #tpu.memory_space<smem>>
    %22 = vector.broadcast %21 : f32 to vector<1x256xf32>
    %23 = arith.addf %20, %22 : vector<1x256xf32>
    %cst = arith.constant 0.000000e+00 : f32
    %24 = vector.broadcast %cst : f32 to vector<1x256xf32>
    %25 = arith.maximumf %23, %24 : vector<1x256xf32>
    %26 = vector.extract_strided_slice %1 {offsets = [0, 0], sizes = [1, 256], strides = [1, 1]} : vector<4x256xf32> to vector<1x256xf32>
    %27 = arith.addf %25, %26 : vector<1x256xf32>
    %28 = vector.extract_strided_slice %1 {offsets = [0, 0], sizes = [1, 256], strides = [1, 1]} : vector<4x256xf32> to vector<1x256xf32>
    %c1_8 = arith.constant 1 : index
    %c0_9 = arith.constant 0 : index
    %29 = memref.load %arg3[%c1_8, %c0_9] : memref<4x4xf32, #tpu.memory_space<smem>>
    %30 = vector.broadcast %29 : f32 to vector<1x256xf32>
    %31 = arith.mulf %28, %30 : vector<1x256xf32>
    %32 = vector.extract_strided_slice %1 {offsets = [1, 0], sizes = [1, 256], strides = [1, 1]} : vector<4x256xf32> to vector<1x256xf32>
    %c1_10 = arith.constant 1 : index
    %c1_11 = arith.constant 1 : index
    %33 = memref.load %arg3[%c1_10, %c1_11] : memref<4x4xf32, #tpu.memory_space<smem>>
    %34 = vector.broadcast %33 : f32 to vector<1x256xf32>
    %35 = arith.mulf %32, %34 : vector<1x256xf32>
    %36 = arith.addf %31, %35 : vector<1x256xf32>
    %37 = vector.extract_strided_slice %1 {offsets = [2, 0], sizes = [1, 256], strides = [1, 1]} : vector<4x256xf32> to vector<1x256xf32>
    %c1_12 = arith.constant 1 : index
    %c2_13 = arith.constant 2 : index
    %38 = memref.load %arg3[%c1_12, %c2_13] : memref<4x4xf32, #tpu.memory_space<smem>>
    %39 = vector.broadcast %38 : f32 to vector<1x256xf32>
    %40 = arith.mulf %37, %39 : vector<1x256xf32>
    %41 = arith.addf %36, %40 : vector<1x256xf32>
    %42 = vector.extract_strided_slice %1 {offsets = [3, 0], sizes = [1, 256], strides = [1, 1]} : vector<4x256xf32> to vector<1x256xf32>
    %c1_14 = arith.constant 1 : index
    %c3_15 = arith.constant 3 : index
    %43 = memref.load %arg3[%c1_14, %c3_15] : memref<4x4xf32, #tpu.memory_space<smem>>
    %44 = vector.broadcast %43 : f32 to vector<1x256xf32>
    %45 = arith.mulf %42, %44 : vector<1x256xf32>
    %46 = arith.addf %41, %45 : vector<1x256xf32>
    %c1_16 = arith.constant 1 : index
    %47 = memref.load %arg4[%c1_16] : memref<4xf32, #tpu.memory_space<smem>>
    %48 = vector.broadcast %47 : f32 to vector<1x256xf32>
    %49 = arith.addf %46, %48 : vector<1x256xf32>
    %cst_17 = arith.constant 0.000000e+00 : f32
    %50 = vector.broadcast %cst_17 : f32 to vector<1x256xf32>
    %51 = arith.maximumf %49, %50 : vector<1x256xf32>
    %52 = vector.extract_strided_slice %1 {offsets = [1, 0], sizes = [1, 256], strides = [1, 1]} : vector<4x256xf32> to vector<1x256xf32>
    %53 = arith.addf %51, %52 : vector<1x256xf32>
    %54 = vector.extract_strided_slice %1 {offsets = [0, 0], sizes = [1, 256], strides = [1, 1]} : vector<4x256xf32> to vector<1x256xf32>
    %c2_18 = arith.constant 2 : index
    %c0_19 = arith.constant 0 : index
    %55 = memref.load %arg3[%c2_18, %c0_19] : memref<4x4xf32, #tpu.memory_space<smem>>
    %56 = vector.broadcast %55 : f32 to vector<1x256xf32>
    %57 = arith.mulf %54, %56 : vector<1x256xf32>
    %58 = vector.extract_strided_slice %1 {offsets = [1, 0], sizes = [1, 256], strides = [1, 1]} : vector<4x256xf32> to vector<1x256xf32>
    %c2_20 = arith.constant 2 : index
    %c1_21 = arith.constant 1 : index
    %59 = memref.load %arg3[%c2_20, %c1_21] : memref<4x4xf32, #tpu.memory_space<smem>>
    %60 = vector.broadcast %59 : f32 to vector<1x256xf32>
    %61 = arith.mulf %58, %60 : vector<1x256xf32>
    %62 = arith.addf %57, %61 : vector<1x256xf32>
    %63 = vector.extract_strided_slice %1 {offsets = [2, 0], sizes = [1, 256], strides = [1, 1]} : vector<4x256xf32> to vector<1x256xf32>
    %c2_22 = arith.constant 2 : index
    %c2_23 = arith.constant 2 : index
    %64 = memref.load %arg3[%c2_22, %c2_23] : memref<4x4xf32, #tpu.memory_space<smem>>
    %65 = vector.broadcast %64 : f32 to vector<1x256xf32>
    %66 = arith.mulf %63, %65 : vector<1x256xf32>
    %67 = arith.addf %62, %66 : vector<1x256xf32>
    %68 = vector.extract_strided_slice %1 {offsets = [3, 0], sizes = [1, 256], strides = [1, 1]} : vector<4x256xf32> to vector<1x256xf32>
    %c2_24 = arith.constant 2 : index
    %c3_25 = arith.constant 3 : index
    %69 = memref.load %arg3[%c2_24, %c3_25] : memref<4x4xf32, #tpu.memory_space<smem>>
    %70 = vector.broadcast %69 : f32 to vector<1x256xf32>
    %71 = arith.mulf %68, %70 : vector<1x256xf32>
    %72 = arith.addf %67, %71 : vector<1x256xf32>
    %c2_26 = arith.constant 2 : index
    %73 = memref.load %arg4[%c2_26] : memref<4xf32, #tpu.memory_space<smem>>
    %74 = vector.broadcast %73 : f32 to vector<1x256xf32>
    %75 = arith.addf %72, %74 : vector<1x256xf32>
    %cst_27 = arith.constant 0.000000e+00 : f32
    %76 = vector.broadcast %cst_27 : f32 to vector<1x256xf32>
    %77 = arith.maximumf %75, %76 : vector<1x256xf32>
    %78 = vector.extract_strided_slice %1 {offsets = [2, 0], sizes = [1, 256], strides = [1, 1]} : vector<4x256xf32> to vector<1x256xf32>
    %79 = arith.addf %77, %78 : vector<1x256xf32>
    %80 = vector.extract_strided_slice %1 {offsets = [0, 0], sizes = [1, 256], strides = [1, 1]} : vector<4x256xf32> to vector<1x256xf32>
    %c3_28 = arith.constant 3 : index
    %c0_29 = arith.constant 0 : index
    %81 = memref.load %arg3[%c3_28, %c0_29] : memref<4x4xf32, #tpu.memory_space<smem>>
    %82 = vector.broadcast %81 : f32 to vector<1x256xf32>
    %83 = arith.mulf %80, %82 : vector<1x256xf32>
    %84 = vector.extract_strided_slice %1 {offsets = [1, 0], sizes = [1, 256], strides = [1, 1]} : vector<4x256xf32> to vector<1x256xf32>
    %c3_30 = arith.constant 3 : index
    %c1_31 = arith.constant 1 : index
    %85 = memref.load %arg3[%c3_30, %c1_31] : memref<4x4xf32, #tpu.memory_space<smem>>
    %86 = vector.broadcast %85 : f32 to vector<1x256xf32>
    %87 = arith.mulf %84, %86 : vector<1x256xf32>
    %88 = arith.addf %83, %87 : vector<1x256xf32>
    %89 = vector.extract_strided_slice %1 {offsets = [2, 0], sizes = [1, 256], strides = [1, 1]} : vector<4x256xf32> to vector<1x256xf32>
    %c3_32 = arith.constant 3 : index
    %c2_33 = arith.constant 2 : index
    %90 = memref.load %arg3[%c3_32, %c2_33] : memref<4x4xf32, #tpu.memory_space<smem>>
    %91 = vector.broadcast %90 : f32 to vector<1x256xf32>
    %92 = arith.mulf %89, %91 : vector<1x256xf32>
    %93 = arith.addf %88, %92 : vector<1x256xf32>
    %94 = vector.extract_strided_slice %1 {offsets = [3, 0], sizes = [1, 256], strides = [1, 1]} : vector<4x256xf32> to vector<1x256xf32>
    %c3_34 = arith.constant 3 : index
    %c3_35 = arith.constant 3 : index
    %95 = memref.load %arg3[%c3_34, %c3_35] : memref<4x4xf32, #tpu.memory_space<smem>>
    %96 = vector.broadcast %95 : f32 to vector<1x256xf32>
    %97 = arith.mulf %94, %96 : vector<1x256xf32>
    %98 = arith.addf %93, %97 : vector<1x256xf32>
    %c3_36 = arith.constant 3 : index
    %99 = memref.load %arg4[%c3_36] : memref<4xf32, #tpu.memory_space<smem>>
    %100 = vector.broadcast %99 : f32 to vector<1x256xf32>
    %101 = arith.addf %98, %100 : vector<1x256xf32>
    %cst_37 = arith.constant 0.000000e+00 : f32
    %102 = vector.broadcast %cst_37 : f32 to vector<1x256xf32>
    %103 = arith.maximumf %101, %102 : vector<1x256xf32>
    %104 = vector.extract_strided_slice %1 {offsets = [3, 0], sizes = [1, 256], strides = [1, 1]} : vector<4x256xf32> to vector<1x256xf32>
    %105 = arith.addf %103, %104 : vector<1x256xf32>
    %106 = tpu.concatenate %27, %53, %79, %105 in 0 : vector<1x256xf32>, vector<1x256xf32>, vector<1x256xf32>, vector<1x256xf32> -> vector<4x256xf32>
    %c0_38 = arith.constant 0 : index
    %c0_39 = arith.constant 0 : index
    %c0_40 = arith.constant 0 : index
    %107 = vector.load %arg5[%c0_38, %c0_39, %c0_40] : memref<1x4x256xf32, #tpu.memory_space<vmem>>, vector<1x4x256xf32>
    %108 = vector.shape_cast %107 : vector<1x4x256xf32> to vector<4x256xf32>
    %109 = vector.shape_cast %106 : vector<4x256xf32> to vector<1x4x256xf32>
    tpu.vector_store %arg5[%c0_38, %c0_39, %c0_40], %109 {strides = array<i32>} : memref<1x4x256xf32, #tpu.memory_space<vmem>>, vector<1x4x256xf32>,
    return
  }
  func.func @transform_0(%arg0: i32, %arg1: i32) -> (i32, i32, i32) {
    %c0_i32 = arith.constant 0 : i32
    %c0_i32_0 = arith.constant 0 : i32
    return %arg0, %c0_i32, %arg1 : i32, i32, i32
  }
  func.func @transform_1(%arg0: i32, %arg1: i32) -> (i32, i32) {
    %c0_i32 = arith.constant 0 : i32
    %c0_i32_0 = arith.constant 0 : i32
    %c0_i32_1 = arith.constant 0 : i32
    return %c0_i32, %c0_i32_0 : i32, i32
  }
  func.func @transform_2(%arg0: i32, %arg1: i32) -> i32 {
    %c0_i32 = arith.constant 0 : i32
    %c0_i32_0 = arith.constant 0 : i32
    return %c0_i32 : i32
  }
  func.func @transform_3(%arg0: i32, %arg1: i32) -> (i32, i32, i32) {
    %c0_i32 = arith.constant 0 : i32
    %c0_i32_0 = arith.constant 0 : i32
    return %arg0, %c0_i32, %arg1 : i32, i32, i32
  }
}

</mosaic_0001>

<llo_original>
// kernel: tpu_custom_call.1
$region0: #{tpu_custom_call.1}
  #allocation0 [shape = 'u32[]', space=smem, size = 0x4, offset = 0x4, fixed_abs, tag = 'smem constant byte address 0x4 - core index']
  #allocation1 [shape = 'u32[144,128]{1,0:T(1,128)}', space=vmem, size = 0x12000, scoped, tag = 'internal scratch']
  %s0 = inlined_call_operand.hbm [shape: f32[2,4,256], index: 0, kind: input, shape index: {}]
  %s1 = inlined_call_operand.hbm [shape: f32[4,4], index: 1, kind: input, shape index: {}]
  %s2 = inlined_call_operand.vmem [shape: f32[4], index: 2, kind: input, shape index: {}]
  %s3 = inlined_call_operand.hbm [shape: f32[2,4,256], index: 3, kind: output, shape index: {}]
  %s4 = sld [smem:[#allocation0]]
  $region57: #{tpu_custom_call.1} parent=0
    _
  %s6 = ssub.s32 1, %s4
  %s7 = scalar_select 0, %s6, %s4
  $region1: #{tpu_custom_call.1} parent=0
    #allocation2 [shape = 'u8[8192]{0}', space=vmem, size = 0x2000, scoped, tag = 'input window, operand 0']
    #allocation3 [shape = 's32[2]{0}', space=sflag, size = 0x8, scoped, tag = 'scoped memory for tpu_custom_call.1']
    #allocation4 [shape = 's32[2]{0}', space=sflag, size = 0x8, scoped, tag = 'scoped memory for tpu_custom_call.1']
    #allocation5 [shape = 's32[2]{0}', space=sflag, size = 0x8, scoped, tag = 'scoped memory for tpu_custom_call.1']
    #allocation6 [shape = 's32[2]{0}', space=sflag, size = 0x8, scoped, tag = 'scoped memory for tpu_custom_call.1']
    #allocation7 [shape = 'u8[2048]{0}', space=smem, size = 0x800, scoped, tag = 'input window, operand 1, single buffered']
    #allocation8 [shape = 'u8[512]{0}', space=smem, size = 0x200, scoped, tag = 'input window, operand 2, single buffered']
    #allocation9 [shape = 'u8[8192]{0}', space=vmem, size = 0x2000, scoped, tag = 'output window, operand 0']
    %8 = vsyncpa [#allocation3], 0
    %s9 = scalar_lea.sflag [#allocation3], 1
    %10 = vsyncpa %s9, 0
    %11 = vsyncpa [#allocation5], 0
    %12 = vsyncpa [#allocation6], 0
    %13 = vsyncpa [#allocation4], 0
    %s14 = scalar_lea.sflag [#allocation4], 1
    %15 = vsyncpa %s14, 0
    loop: start=0, step=1, limit=4
    $region2: #{tpu_custom_call.1} parent=1 // loop_pre_header
      _
    $region3: #{tpu_custom_call.1} parent=1 // loop_header
      %s17 = sphi 0, %s21
      %p18 = scmp.ge.s32.totalorder %s17, 4
      %s24 = sphi 0, %s36
      %s25 = sphi 0, %s32
      %s26 = sphi 0, %s24
      %s27 = sphi 0, %s25
      %s28 = sphi 0, %s26
      %s29 = sphi 0, %s27
      %s41 = sphi 0, %s43
      %s44 = sphi 0, %s41
      %s45 = sphi 0, %s44
      %s61 = sphi 0, %s45
      %s65 = sphi 0, %s65
      %s67 = sphi 0, %s65
      %s68 = sphi 0, %s67
      %s82 = sphi 0, %s68
      %s86 = sphi 0, %s86
      %s88 = sphi 0, %s86
      %s89 = sphi 0, %s88
      %s103 = sphi 0, %s89
      %s111 = sphi 0, %s113
      %s114 = sphi 0, %s111
      %s115 = sphi 0, %s114
      %s131 = sphi 0, %s115
    $region4: #{tpu_custom_call.1} parent=1 // loop_header_branch
      %20 = sbr.rel (%p18) target = $region8
    $region5: #{tpu_custom_call.1} parent=1 // loop_body
      %s22 = ssub.s32 %s17, 1
      %s23 = ssub.s32 %s17, 2
      %s30 = sadd.s32 1, %s25
      %p31 = scmp.ge.s32.totalorder %s30, 1
      %s32 = scalar_select %p31, 0, %s30
      %s33 = sadd.s32 1, %s24
      %s34 = scalar_select %p31, %s33, %s24
      %p35 = scmp.ge.s32.totalorder %s34, 2
      %s36 = scalar_select %p35, 0, %s34
      %s37 = ssub.s32 %s24, %s36
      %s38 = ssub.s32 %s25, %s32
      %s39 = sor.u32 %s37, %s38
      %p40 = scmp.eq.s32.totalorder %s39, 0
      %s42 = sadd.s32 %s41, 1
      %s43 = scalar_select %p40, %s41, %s42
      %p46 = pneg %p40
      %p47 = scmp.eq.s32.totalorder %s17, 1
      %p48 = por %p46, %p47
      %p49 = scmp.ne.s32.totalorder %s41, %s44
      %p50 = scmp.eq.s32.totalorder %s17, 0
      %p51 = por %p49, %p50
      %p52 = scmp.ne.s32.totalorder %s41, %s44
      %p53 = scmp.eq.s32.totalorder %s22, 1
      %p54 = por %p52, %p53
      %p55 = scmp.ne.s32.totalorder %s44, %s45
      %p56 = scmp.eq.s32.totalorder %s22, 0
      %p57 = por %p55, %p56
      %p58 = scmp.ne.s32.totalorder %s44, %s45
      %p59 = scmp.eq.s32.totalorder %s23, 1
      %p60 = por %p58, %p59
      %p62 = scmp.ne.s32.totalorder %s45, %s61
      %p63 = scmp.eq.s32.totalorder %s23, 0
      %p64 = por %p62, %p63
      %s66 = sadd.s32 %s65, 1
      %p69 = scmp.eq.s32.totalorder %s17, 1
      %p70 = scmp.ne.s32.totalorder %s65, %s67
      %p71 = scmp.eq.s32.totalorder %s17, 0
      %p72 = por %p70, %p71
      %p73 = scmp.ne.s32.totalorder %s65, %s67
      %p74 = scmp.eq.s32.totalorder %s22, 1
      %p75 = por %p73, %p74
      %p76 = scmp.ne.s32.totalorder %s67, %s68
      %p77 = scmp.eq.s32.totalorder %s22, 0
      %p78 = por %p76, %p77
      %p79 = scmp.ne.s32.totalorder %s67, %s68
      %p80 = scmp.eq.s32.totalorder %s23, 1
      %p81 = por %p79, %p80
      %p83 = scmp.ne.s32.totalorder %s68, %s82
      %p84 = scmp.eq.s32.totalorder %s23, 0
      %p85 = por %p83, %p84
      %s87 = sadd.s32 %s86, 1
      %p90 = scmp.eq.s32.totalorder %s17, 1
      %p91 = scmp.ne.s32.totalorder %s86, %s88
      %p92 = scmp.eq.s32.totalorder %s17, 0
      %p93 = por %p91, %p92
      %p94 = scmp.ne.s32.totalorder %s86, %s88
      %p95 = scmp.eq.s32.totalorder %s22, 1
      %p96 = por %p94, %p95
      %p97 = scmp.ne.s32.totalorder %s88, %s89
      %p98 = scmp.eq.s32.totalorder %s22, 0
      %p99 = por %p97, %p98
      %p100 = scmp.ne.s32.totalorder %s88, %s89
      %p101 = scmp.eq.s32.totalorder %s23, 1
      %p102 = por %p100, %p101
      %p104 = scmp.ne.s32.totalorder %s89, %s103
      %p105 = scmp.eq.s32.totalorder %s23, 0
      %p106 = por %p104, %p105
      %s107 = ssub.s32 %s24, %s36
      %s108 = ssub.s32 %s25, %s32
      %s109 = sor.u32 %s107, %s108
      %p110 = scmp.eq.s32.totalorder %s109, 0
      %s112 = sadd.s32 %s111, 1
      %s113 = scalar_select %p110, %s111, %s112
      %p116 = pneg %p110
      %p117 = scmp.eq.s32.totalorder %s17, 1
      %p118 = por %p116, %p117
      %p119 = scmp.ne.s32.totalorder %s111, %s114
      %p120 = scmp.eq.s32.totalorder %s17, 0
      %p121 = por %p119, %p120
      %p122 = scmp.ne.s32.totalorder %s111, %s114
      %p123 = scmp.eq.s32.totalorder %s22, 1
      %p124 = por %p122, %p123
      %p125 = scmp.ne.s32.totalorder %s114, %s115
      %p126 = scmp.eq.s32.totalorder %s22, 0
      %p127 = por %p125, %p126
      %p128 = scmp.ne.s32.totalorder %s114, %s115
      %p129 = scmp.eq.s32.totalorder %s23, 1
      %p130 = por %p128, %p129
      %p132 = scmp.ne.s32.totalorder %s115, %s131
      %p133 = scmp.eq.s32.totalorder %s23, 0
      %p134 = por %p132, %p133
      %p135 = scmp.le.s32.totalorder 1, %s17
      %p136 = scmp.lt.s32.totalorder %s17, 3
      %p137 = pnand %p135, %p136
      %p138 = pneg %p137
      // Predicated region
      $region9: #{tpu_custom_call.1} parent=5 // pred_check
        _
      $region10: #{tpu_custom_call.1} parent=5 // pred_check_branch
        %140 = sbr.rel (%p137) target = $region12
      $region11: #{tpu_custom_call.1} parent=5 // pred_region
        %s141 = ssub.s32 %s17, 1
        // Predicated region
        $region13: #{tpu_custom_call.1} parent=11 // pred_check
          %p142 = pneg %p78
        $region14: #{tpu_custom_call.1} parent=11 // pred_check_branch
          %144 = sbr.rel (%p142) target = $region16
        $region15: #{tpu_custom_call.1} parent=11 // pred_region
          %s146 = ssub.s32 64, 64
          %147 = vsyncadd [#allocation5], %s146
          %150 = dma.hbm_to_smem %s1, 64, [#allocation7], [#allocation5]
        $region16: #{tpu_custom_call.1} parent=11 // pred_fallthru
          _
        // Predicated region
        $region17: #{tpu_custom_call.1} parent=11 // pred_check
          %p151 = pneg %p99
        $region18: #{tpu_custom_call.1} parent=11 // pred_check_branch
          %153 = sbr.rel (%p151) target = $region20
        $region19: #{tpu_custom_call.1} parent=11 // pred_region
          %s155 = ssub.s32 16, 16
          %156 = vsyncadd [#allocation6], %s155
          %s158 = sshll.u32 %s2, 4
          %s159 = int_to_ptr.vmem [resolvable:$true] %s158
          %161 = dma.vmem_to_smem %s159, 16, [#allocation8], [#allocation6]
        $region20: #{tpu_custom_call.1} parent=11 // pred_fallthru
          _
      $region12: #{tpu_custom_call.1} parent=5 // pred_fallthru
        _
      %p162 = scmp.lt.s32.totalorder %s17, 2
      // Predicated region
      $region21: #{tpu_custom_call.1} parent=5 // pred_check
        %p163 = pneg %p162
      $region22: #{tpu_custom_call.1} parent=5 // pred_check_branch
        %165 = sbr.rel (%p163) target = $region24
      $region23: #{tpu_custom_call.1} parent=5 // pred_region
        // Predicated region
        $region25: #{tpu_custom_call.1} parent=23 // pred_check
          %p166 = pneg %p51
        $region26: #{tpu_custom_call.1} parent=23 // pred_check_branch
          %168 = sbr.rel (%p166) target = $region28
        $region27: #{tpu_custom_call.1} parent=23 // pred_region
          %s169 = sand.u32 %s41, 1
          %s170 = scalar_lea.sflag [#allocation3], %s169
          %s171 = sand.u32 %s41, 1
          %s172 = smul.addr %s171, 8
          %s173 = scalar_lea.vmem [#allocation2], %s172
          %s174 = smul.u32 2, %s25
          %s176 = ssub.s32 128, 128
          %177 = vsyncadd %s170, %s176
          %s178 = smul.addr %s24, 2
          %s179 = sadd.s32 %s174, %s178
          %s180 = smul.addr %s179, 64
          %s181 = scalar_lea.hbm %s0, %s180
          %s183 = sshll.u32 %s173, 4
          %s184 = int_to_ptr.vmem [resolvable:$true] %s183
          %186 = dma.hbm_to_vmem [thread:$0]  %s181, 128, %s184, %s170
        $region28: #{tpu_custom_call.1} parent=23 // pred_fallthru
          _
      $region24: #{tpu_custom_call.1} parent=5 // pred_fallthru
        _
      %p187 = scmp.le.s32.totalorder 1, %s17
      %p188 = scmp.lt.s32.totalorder %s17, 3
      %p189 = pnand %p187, %p188
      %p190 = pneg %p189
      // Predicated region
      $region29: #{tpu_custom_call.1} parent=5 // pred_check
        _
      $region30: #{tpu_custom_call.1} parent=5 // pred_check_branch
        %192 = sbr.rel (%p189) target = $region32
      $region31: #{tpu_custom_call.1} parent=5 // pred_region
        %s193 = ssub.s32 %s17, 1
        %s194 = sand.u32 %s44, 1
        %s195 = scalar_lea.sflag [#allocation3], %s194
        %s196 = sand.u32 %s44, 1
        %s197 = smul.addr %s196, 8
        %s198 = scalar_lea.vmem [#allocation2], %s197
        // Predicated region
        $region33: #{tpu_custom_call.1} parent=31 // pred_check
          %p199 = pneg %p57
        $region34: #{tpu_custom_call.1} parent=31 // pred_check_branch
          %201 = sbr.rel (%p199) target = $region36
        $region35: #{tpu_custom_call.1} parent=31 // pred_region
          %202 = dma.done %s195, 128
        $region36: #{tpu_custom_call.1} parent=31 // pred_fallthru
          _
        // Predicated region
        $region37: #{tpu_custom_call.1} parent=31 // pred_check
          %p203 = pneg %p78
        $region38: #{tpu_custom_call.1} parent=31 // pred_check_branch
          %205 = sbr.rel (%p203) target = $region40
        $region39: #{tpu_custom_call.1} parent=31 // pred_region
          %206 = dma.done [#allocation5], 64
        $region40: #{tpu_custom_call.1} parent=31 // pred_fallthru
          _
        // Predicated region
        $region41: #{tpu_custom_call.1} parent=31 // pred_check
          %p207 = pneg %p99
        $region42: #{tpu_custom_call.1} parent=31 // pred_check_branch
          %209 = sbr.rel (%p207) target = $region44
        $region43: #{tpu_custom_call.1} parent=31 // pred_region
          %210 = dma.done [#allocation6], 16
        $region44: #{tpu_custom_call.1} parent=31 // pred_fallthru
          _
        %211 = sfence
        %s212 = sand.u32 %s44, 1
        %s213 = scalar_lea.sflag [#allocation3], %s212
        %s214 = sand.u32 %s44, 1
        %s215 = smul.addr %s214, 8
        %s216 = scalar_lea.vmem [#allocation2], %s215
        %p217 = pneg %p57
        %p218 = pneg %p54
        %p219 = pneg %p78
        %p220 = pneg %p75
        %p221 = pneg %p99
        %p222 = pneg %p96
        %p223 = pneg %p127
        %p224 = pneg %p124
        %s225 = sand.u32 %s114, 1
        %s226 = scalar_lea.sflag [#allocation4], %s225
        %s227 = sand.u32 %s114, 1
        %s228 = smul.addr %s227, 8
        %s229 = scalar_lea.vmem [#allocation9], %s228
        %s230 = smul.u32 2, %s27
        %s231 = smul.u32 2, %s27
        %v232 = vld [vmem:[%s198] sm:$0xff]
        %s233 = sld [smem:[#allocation7]]
        %v234 = vstv %s233
        %v235 = vmul.f32 %v232, %v234
        %s236 = sld [smem:[#allocation7 + $0x1]]
        %v237 = vstv %s236
        %v238 = vmul.f32 %v232, %v237
        %v240 = vrot.slane %v238, 5
        %v241 = vrot.slane %v240, 4
        %v243 = vadd.f32 %v235, %v241
        %s244 = sld [smem:[#allocation7 + $0x2]]
        %v245 = vstv %s244
        %v246 = vmul.f32 %v232, %v245
        %v248 = vrot.slane %v246, 6
        %v249 = vrot.slane %v248, 4
        %v251 = vadd.f32 %v243, %v249
        %s252 = sld [smem:[#allocation7 + $0x3]]
        %v253 = vstv %s252
        %v254 = vmul.f32 %v232, %v253
        %v256 = vrot.slane %v254, 7
        %v257 = vrot.slane %v256, 4
        %v259 = vadd.f32 %v251, %v257
        %s260 = sld [smem:[#allocation8]]
        %v261 = vstv %s260
        %v262 = vadd.f32 %v259, %v261
        %v263 = vmax.f32 %v262, 0.0
        %v264 = vadd.f32 %v263, %v232
        %s265 = sld [smem:[#allocation7 + $0x80]]
        %v266 = vstv %s265
        %v267 = vmul.f32 %v232, %v266
        %s268 = sld [smem:[#allocation7 + $0x81]]
        %v269 = vstv %s268
        %v270 = vmul.f32 %v232, %v269
        %v272 = vrot.slane %v270, 5
        %v273 = vrot.slane %v272, 4
        %v275 = vadd.f32 %v267, %v273
        %s276 = sld [smem:[#allocation7 + $0x82]]
        %v277 = vstv %s276
        %v278 = vmul.f32 %v232, %v277
        %v280 = vrot.slane %v278, 6
        %v281 = vrot.slane %v280, 4
        %v283 = vadd.f32 %v275, %v281
        %s284 = sld [smem:[#allocation7 + $0x83]]
        %v285 = vstv %s284
        %v286 = vmul.f32 %v232, %v285
        %v288 = vrot.slane %v286, 7
        %v289 = vrot.slane %v288, 4
        %v291 = vadd.f32 %v283, %v289
        %s292 = sld [smem:[#allocation8 + $0x1]]
        %v293 = vstv %s292
        %v294 = vadd.f32 %v291, %v293
        %v295 = vmax.f32 %v294, 0.0
        %v297 = vrot.slane %v232, 5
        %v298 = vrot.slane %v297, 4
        %v300 = vadd.f32 %v295, %v298
        %s301 = sld [smem:[#allocation7 + $0x100]]
        %v302 = vstv %s301
        %v303 = vmul.f32 %v232, %v302
        %s304 = sld [smem:[#allocation7 + $0x101]]
        %v305 = vstv %s304
        %v306 = vmul.f32 %v232, %v305
        %v308 = vrot.slane %v306, 5
        %v309 = vrot.slane %v308, 4
        %v311 = vadd.f32 %v303, %v309
        %s312 = sld [smem:[#allocation7 + $0x102]]
        %v313 = vstv %s312
        %v314 = vmul.f32 %v232, %v313
        %v316 = vrot.slane %v314, 6
        %v317 = vrot.slane %v316, 4
        %v319 = vadd.f32 %v311, %v317
        %s320 = sld [smem:[#allocation7 + $0x103]]
        %v321 = vstv %s320
        %v322 = vmul.f32 %v232, %v321
        %v324 = vrot.slane %v322, 7
        %v325 = vrot.slane %v324, 4
        %v327 = vadd.f32 %v319, %v325
        %s328 = sld [smem:[#allocation8 + $0x2]]
        %v329 = vstv %s328
        %v330 = vadd.f32 %v327, %v329
        %v331 = vmax.f32 %v330, 0.0
        %v332 = vrot.slane %v232, 6
        %v333 = vrot.slane %v332, 4
        %v335 = vadd.f32 %v331, %v333
        %s336 = sld [smem:[#allocation7 + $0x180]]
        %v337 = vstv %s336
        %v338 = vmul.f32 %v232, %v337
        %s339 = sld [smem:[#allocation7 + $0x181]]
        %v340 = vstv %s339
        %v341 = vmul.f32 %v232, %v340
        %v343 = vrot.slane %v341, 5
        %v344 = vrot.slane %v343, 4
        %v346 = vadd.f32 %v338, %v344
        %s347 = sld [smem:[#allocation7 + $0x182]]
        %v348 = vstv %s347
        %v349 = vmul.f32 %v232, %v348
        %v351 = vrot.slane %v349, 6
        %v352 = vrot.slane %v351, 4
        %v354 = vadd.f32 %v346, %v352
        %s355 = sld [smem:[#allocation7 + $0x183]]
        %v356 = vstv %s355
        %v357 = vmul.f32 %v232, %v356
        %v359 = vrot.slane %v357, 7
        %v360 = vrot.slane %v359, 4
        %v362 = vadd.f32 %v354, %v360
        %s363 = sld [smem:[#allocation8 + $0x3]]
        %v364 = vstv %s363
        %v365 = vadd.f32 %v362, %v364
        %v366 = vmax.f32 %v365, 0.0
        %v367 = vrot.slane %v232, 7
        %v368 = vrot.slane %v367, 4
        %v370 = vadd.f32 %v366, %v368
        %v372 = vlaneseq
        %v373 = vshrl.u32 %v372, 7
        %v374 = vsub.s32 0, %v373
        %v375 = vrot.slane %v264, %v374
        %v376 = vlaneseq
        %v377 = vshrl.u32 %v376, 7
        %v378 = vsub.s32 4, %v377
        %v379 = vrot.slane %v264, %v378
        %v383 = vlaneseq
        %v384 = vshrl.u32 %v383, 7
        %v385 = vsub.s32 0, %v384
        %v386 = vrot.slane %v300, %v385
        %v387 = vlaneseq
        %v388 = vshrl.u32 %v387, 7
        %v389 = vsub.s32 4, %v388
        %v390 = vrot.slane %v300, %v389
        %v394 = vlaneseq
        %v395 = vshrl.u32 %v394, 7
        %v396 = vsub.s32 0, %v395
        %v397 = vrot.slane %v335, %v396
        %v398 = vlaneseq
        %v399 = vshrl.u32 %v398, 7
        %v400 = vsub.s32 4, %v399
        %v401 = vrot.slane %v335, %v400
        %v405 = vlaneseq
        %v406 = vshrl.u32 %v405, 7
        %v407 = vsub.s32 0, %v406
        %v408 = vrot.slane %v370, %v407
        %v409 = vlaneseq
        %v410 = vshrl.u32 %v409, 7
        %v411 = vsub.s32 4, %v410
        %v412 = vrot.slane %v370, %v411
        %vm415 = vcmask 1040384
        %v416 = vsel %vm415, %v375, %v386
        %v417 = vsel %vm415, %v379, %v390
        %vm418 = vcmask 1041408
        %v419 = vsel %vm418, %v416, %v397
        %v420 = vsel %vm418, %v417, %v401
        %vm421 = vcmask 1042432
        %v422 = vsel %vm421, %v419, %v408
        %v423 = vsel %vm421, %v420, %v412
        %v426 = vcombine.low %v422, %v423
        %428 = vst [vmem:[%s229] sm:$0xff] %v426
        %s429 = sand.u32 %s114, 1
        %s430 = scalar_lea.sflag [#allocation4], %s429
        %s431 = sand.u32 %s114, 1
        %s432 = smul.addr %s431, 8
        %s433 = scalar_lea.vmem [#allocation9], %s432
        // Predicated region
        $region45: #{tpu_custom_call.1} parent=31 // pred_check
          %p434 = pneg %p124
        $region46: #{tpu_custom_call.1} parent=31 // pred_check_branch
          %436 = sbr.rel (%p434) target = $region48
        $region47: #{tpu_custom_call.1} parent=31 // pred_region
          %s437 = smul.u32 2, %s27
          %s439 = ssub.s32 128, 128
          %440 = vsyncadd %s430, %s439
          %s441 = smul.addr %s26, 2
          %s442 = sadd.s32 %s437, %s441
          %s443 = smul.addr %s442, 64
          %s444 = scalar_lea.hbm %s3, %s443
          %s446 = sshll.u32 %s433, 4
          %s447 = int_to_ptr.vmem [resolvable:$true] %s446
          %449 = dma.vmem_to_hbm [thread:$0]  %s447, 128, %s444, %s430
        $region48: #{tpu_custom_call.1} parent=31 // pred_fallthru
          _
      $region32: #{tpu_custom_call.1} parent=5 // pred_fallthru
        _
      %p450 = scmp.le.s32.totalorder 2, %s17
      // Predicated region
      $region49: #{tpu_custom_call.1} parent=5 // pred_check
        %p451 = pneg %p450
      $region50: #{tpu_custom_call.1} parent=5 // pred_check_branch
        %453 = sbr.rel (%p451) target = $region52
      $region51: #{tpu_custom_call.1} parent=5 // pred_region
        %s454 = ssub.s32 %s17, 2
        // Predicated region
        $region53: #{tpu_custom_call.1} parent=51 // pred_check
          %p455 = pneg %p130
        $region54: #{tpu_custom_call.1} parent=51 // pred_check_branch
          %457 = sbr.rel (%p455) target = $region56
        $region55: #{tpu_custom_call.1} parent=51 // pred_region
          %s458 = sand.u32 %s115, 1
          %s459 = scalar_lea.sflag [#allocation4], %s458
          %s460 = sand.u32 %s115, 1
          %s461 = smul.addr %s460, 8
          %s462 = scalar_lea.vmem [#allocation9], %s461
          %463 = dma.done %s459, 128
        $region56: #{tpu_custom_call.1} parent=51 // pred_fallthru
          _
      $region52: #{tpu_custom_call.1} parent=5 // pred_fallthru
        _
    $region6: #{tpu_custom_call.1} parent=1 // loop_footer
      %s21 = sadd.s32 1, %s17
    $region7: #{tpu_custom_call.1} parent=1 // loop_footer_branch
      %16 = sbr.rel target = $region3
    $region8: #{tpu_custom_call.1} parent=1 // loop_exit
      _
    %464 = vsyncpa [#allocation3], 1
    %s465 = scalar_lea.sflag [#allocation3], 1
    %466 = vsyncpa %s465, 1
    %467 = vsyncpa [#allocation4], 1
    %s468 = scalar_lea.sflag [#allocation4], 1
    %469 = vsyncpa %s468, 1
    %470 = vsyncpa [#allocation5], 1
    %s471 = scalar_lea.sflag [#allocation5], 1
    %472 = vsyncpa %s471, 1
    %473 = vsyncpa [#allocation6], 1
    %s474 = scalar_lea.sflag [#allocation6], 1
    %475 = vsyncpa %s474, 1

</llo_original>
